<compile_context>
chip_gen: v7x
topology: tpu7x:2x2x1
jax: 0.10.0
libtpu: 0.0.40
codegen_flags: <defaults>
</compile_context>

<pallas_src>
import functools
import math

import jax
import jax.numpy as jnp
from jax.experimental import pallas as pl
from jax.experimental.pallas import tpu as pltpu

_MAX_LANE_BLOCK = 1024                   # lane-dense last-dim block (multiple of 128)
_TARGET_BLOCK_ELEMS = 1 << 20            # ~4 MiB of f32 per operand per grid step
_VMEM_LIMIT_BYTES = 48 * 1024 * 1024     # 4 operands x 2 bufs x 4 MiB = 32 MiB + headroom


def _fma_kernel(x_ref, sub_t_ref, add_t_ref, o_ref):
    # Fused hot path: sub_mod(x) + tensor  ==  sub_tensor * x + add_tensor
    o_ref[...] = sub_t_ref[...] * x_ref[...] + add_t_ref[...]


def _free_2d_view(n, shape):
    """Pick (R, C) with R*C == n so that a contiguous array can be re-viewed as (R, C)
    with zero data movement, preferring a lane-dense C (multiple of 128, <= 1024)."""
    for c in (1024, 512, 256, 128):
        if n % c == 0:
            return n // c, c
    if len(shape) >= 2:
        # Merge leading dims (free for contiguous row-major); lane tail is masked in-kernel.
        return n // shape[-1], shape[-1]
    # TODO(synk): misaligned 1-D inputs fall back to a single (1, n) row (correct, not peak).
    return 1, n


def _choose_block(rows, cols, target_elems):
    """Block shape: last dim is full-C or a 128-multiple; rows are full-R or a multiple
    of 8.  Ragged last blocks along either axis are masked by the Pallas pipeline."""
    block_c = cols if cols <= _MAX_LANE_BLOCK else _MAX_LANE_BLOCK
    rows_target = max(1, target_elems // block_c)
    if rows_target >= rows:
        block_r = rows
    else:
        block_r = max(8, (rows_target // 8) * 8)
    return block_r, block_c


def mod_with_submod_and_tensor(x, sub_tensor, add_tensor, *, donate_x=False,
                               target_block_elems=_TARGET_BLOCK_ELEMS):
    """Pallas implementation of
    ModWithSubmodAndTensor(tensor=add_tensor, sub_mod=ModWithTensor(sub_tensor)).forward(x).

    donate_x: set True only if the caller donates x's buffer (adds input_output_aliases);
    otherwise XLA would insert a defensive copy and hurt this bandwidth-bound kernel.
    """
    assert x.shape == sub_tensor.shape == add_tensor.shape
    assert x.dtype == sub_tensor.dtype == add_tensor.dtype

    orig_shape = x.shape
    n = math.prod(orig_shape) if orig_shape else 1

    rows, cols = _free_2d_view(n, orig_shape)
    block_r, block_c = _choose_block(rows, cols, target_block_elems)
    grid = (pl.cdiv(rows, block_r), pl.cdiv(cols, block_c))

    # Free re-views (contiguous reshape == bitcast under jit); no padding, no copies.
    xv = x.reshape(rows, cols)
    sv = sub_tensor.reshape(rows, cols)
    av = add_tensor.reshape(rows, cols)

    spec = pl.BlockSpec((block_r, block_c), lambda i, j: (i, j))

    extra = {}
    if donate_x:
        extra["input_output_aliases"] = {0: 0}

    out = pl.pallas_call(
        _fma_kernel,
        out_shape=jax.ShapeDtypeStruct((rows, cols), x.dtype),
        grid=grid,
        in_specs=[spec, spec, spec],
        out_specs=spec,
        compiler_params=pltpu.CompilerParams(
            dimension_semantics=("parallel", "parallel"),
            vmem_limit_bytes=_VMEM_LIMIT_BYTES,
        ),
        **extra,
    )(xv, sv, av)

    return out.reshape(orig_shape)   # free reshape; no slice needed


def reference(x, sub_tensor, add_tensor):
    return sub_tensor * x + add_tensor


def _check(shape, key, **kw):
    k_x, k_sub, k_add = jax.random.split(key, 3)
    x = jax.random.normal(k_x, shape, dtype=jnp.float32)
    sub_tensor = jax.random.normal(k_sub, shape, dtype=jnp.float32)   # ModWithTensor.tensor
    add_tensor = jax.random.normal(k_add, shape, dtype=jnp.float32)   # ModWithSubmodAndTensor.tensor

    fn = jax.jit(functools.partial(mod_with_submod_and_tensor, **kw))
    out = jax.block_until_ready(fn(x, sub_tensor, add_tensor))
    ref = reference(x, sub_tensor, add_tensor)
    assert out.shape == ref.shape and out.dtype == ref.dtype
    assert jnp.allclose(out, ref, atol=1e-6, rtol=1e-6)


if __name__ == "__main__":
    key = jax.random.PRNGKey(0)
    k0, k1, k2, k3 = jax.random.split(key, 4)

    # Small shape consistent with the (generic elementwise) module: lane-dense (2, 1024) view.
    _check((2, 4, 16, 16), k0)
    # Misaligned element count: natural (523, 717) view, no pad / no slice, single block.
    _check((523, 717), k1)
    # Force the ragged multi-row-block path (last row block partially out of bounds, masked).
    _check((523, 717), k2, target_block_elems=64 * 1024)
    # Last dim > 1024 and not a multiple of 128: exercises the ragged lane-tail block.
    _check((16, 1111), k3)

    print("KERNEL_OK")
</pallas_src>

<mosaic_0001>
module attributes {stable_mosaic.version = 11 : i64} {
  func.func @_fma_kernel(%arg0: i32, %arg1: i32, %arg2: memref<2x1024xf32, #tpu.memory_space<vmem>>, %arg3: memref<2x1024xf32, #tpu.memory_space<vmem>>, %arg4: memref<2x1024xf32, #tpu.memory_space<vmem>>, %arg5: memref<2x1024xf32, #tpu.memory_space<vmem>>) attributes {dimension_semantics = [#tpu.dimension_semantics<parallel>, #tpu.dimension_semantics<parallel>], iteration_bounds = array<i64: 1, 1>, scalar_prefetch = 0 : i64, scratch_operands = 0 : i64, tpu.core_type = #tpu.core_type<tc>, window_params = [{transform_indices = @transform_0, window_bounds = array<i64: 2, 1024>}, {transform_indices = @transform_1, window_bounds = array<i64: 2, 1024>}, {transform_indices = @transform_2, window_bounds = array<i64: 2, 1024>}, {transform_indices = @transform_3, window_bounds = array<i64: 2, 1024>}]} {
    %c0 = arith.constant 0 : index
    %c0_0 = arith.constant 0 : index
    %0 = vector.load %arg3[%c0, %c0_0] : memref<2x1024xf32, #tpu.memory_space<vmem>>, vector<2x1024xf32>
    %c0_1 = arith.constant 0 : index
    %c0_2 = arith.constant 0 : index
    %1 = vector.load %arg2[%c0_1, %c0_2] : memref<2x1024xf32, #tpu.memory_space<vmem>>, vector<2x1024xf32>
    %2 = arith.mulf %0, %1 : vector<2x1024xf32>
    %c0_3 = arith.constant 0 : index
    %c0_4 = arith.constant 0 : index
    %3 = vector.load %arg4[%c0_3, %c0_4] : memref<2x1024xf32, #tpu.memory_space<vmem>>, vector<2x1024xf32>
    %4 = arith.addf %2, %3 : vector<2x1024xf32>
    %c0_5 = arith.constant 0 : index
    %c0_6 = arith.constant 0 : index
    %5 = vector.load %arg5[%c0_5, %c0_6] : memref<2x1024xf32, #tpu.memory_space<vmem>>, vector<2x1024xf32>
    tpu.vector_store %arg5[%c0_5, %c0_6], %4 {strides = array<i32>} : memref<2x1024xf32, #tpu.memory_space<vmem>>, vector<2x1024xf32>,
    return
  }
  func.func @transform_0(%arg0: i32, %arg1: i32) -> (i32, i32) {
    %c0_i32 = arith.constant 0 : i32
    return %arg0, %arg1 : i32, i32
  }
  func.func @transform_1(%arg0: i32, %arg1: i32) -> (i32, i32) {
    %c0_i32 = arith.constant 0 : i32
    return %arg0, %arg1 : i32, i32
  }
  func.func @transform_2(%arg0: i32, %arg1: i32) -> (i32, i32) {
    %c0_i32 = arith.constant 0 : i32
    return %arg0, %arg1 : i32, i32
  }
  func.func @transform_3(%arg0: i32, %arg1: i32) -> (i32, i32) {
    %c0_i32 = arith.constant 0 : i32
    return %arg0, %arg1 : i32, i32
  }
}

</mosaic_0001>

<llo_original>
// kernel: mod_with_submod_and_tensor.1
$region0: #{mod_with_submod_and_tensor.1}
  #allocation0 [shape = 'u32[]', space=smem, size = 0x4, offset = 0x4, fixed_abs, tag = 'smem constant byte address 0x4 - core index']
  #allocation1 [shape = 'u32[144,128]{1,0:T(1,128)}', space=vmem, size = 0x12000, scoped, tag = 'internal scratch']
  %s0 = inlined_call_operand.vmem [shape: f32[2,1024], index: 0, kind: input, shape index: {}]
  %s1 = inlined_call_operand.vmem [shape: f32[2,1024], index: 1, kind: input, shape index: {}]
  %s2 = inlined_call_operand.vmem [shape: f32[2,1024], index: 2, kind: input, shape index: {}]
  %s3 = inlined_call_operand.vmem [shape: f32[2,1024], index: 3, kind: output, shape index: {}]
  %s4 = sld [smem:[#allocation0]]
  $region22: #{mod_with_submod_and_tensor.1} parent=0
    _
  %s6 = ssub.s32 1, %s4
  %s7 = scalar_select 0, %s6, %s4
  // Predicated region
  $region2: #{mod_with_submod_and_tensor.1} parent=0 // pred_check
    _
  $region3: #{mod_with_submod_and_tensor.1} parent=0 // pred_check_branch
    %9 = sbr.rel (0) target = $region5
  $region4: #{mod_with_submod_and_tensor.1} parent=0 // pred_region
    _
  $region5: #{mod_with_submod_and_tensor.1} parent=0 // pred_fallthru
    _
  // Predicated region
  $region6: #{mod_with_submod_and_tensor.1} parent=0 // pred_check
    _
  $region7: #{mod_with_submod_and_tensor.1} parent=0 // pred_check_branch
    %11 = sbr.rel (0) target = $region9
  $region8: #{mod_with_submod_and_tensor.1} parent=0 // pred_region
    _
  $region9: #{mod_with_submod_and_tensor.1} parent=0 // pred_fallthru
    _
  // Predicated region
  $region10: #{mod_with_submod_and_tensor.1} parent=0 // pred_check
    _
  $region11: #{mod_with_submod_and_tensor.1} parent=0 // pred_check_branch
    %13 = sbr.rel (0) target = $region13
  $region12: #{mod_with_submod_and_tensor.1} parent=0 // pred_region
    _
  $region13: #{mod_with_submod_and_tensor.1} parent=0 // pred_fallthru
    _
  %v14 = vld [vmem:[%s1] sm:$0xff]
  %v15 = vld [vmem:[%s1 + $0x8] sm:$0xff]
  %v16 = vld [vmem:[%s0] sm:$0xff]
  %v17 = vld [vmem:[%s0 + $0x8] sm:$0xff]
  %v18 = vmul.f32 %v14, %v16
  %v19 = vmul.f32 %v15, %v17
  %v20 = vld [vmem:[%s2] sm:$0xff]
  %v21 = vld [vmem:[%s2 + $0x8] sm:$0xff]
  %v22 = vadd.f32 %v18, %v20
  %v23 = vadd.f32 %v19, %v21
  %24 = vst [vmem:[%s3] sm:$0xff] %v22
  %25 = vst [vmem:[%s3 + $0x8] sm:$0xff] %v23
  // Predicated region
  $region14: #{mod_with_submod_and_tensor.1} parent=0 // pred_check
    _
  $region15: #{mod_with_submod_and_tensor.1} parent=0 // pred_check_branch
    %27 = sbr.rel (0) target = $region17
  $region16: #{mod_with_submod_and_tensor.1} parent=0 // pred_region
    _
  $region17: #{mod_with_submod_and_tensor.1} parent=0 // pred_fallthru
    _
  // Predicated region
  $region18: #{mod_with_submod_and_tensor.1} parent=0 // pred_check
    _
  $region19: #{mod_with_submod_and_tensor.1} parent=0 // pred_check_branch
    %29 = sbr.rel (0) target = $region21
  $region20: #{mod_with_submod_and_tensor.1} parent=0 // pred_region
    _
  $region21: #{mod_with_submod_and_tensor.1} parent=0 // pred_fallthru
    _

</llo_original>
